<compile_context>
chip_gen: v6e
topology: v6e:2x2x1
jax: 0.10.0
libtpu: 0.0.40
codegen_flags: <defaults>
</compile_context>

<pallas_src>
import numpy as np
import jax
import jax.numpy as jnp
from jax.experimental import pallas as pl
from jax.experimental.pallas import tpu as pltpu

LANES = 128
MATS_PER_ROW = LANES // 8      # 16 density matrices (8 f32 each) per 128-lane row
BLOCK_ROWS = 1024              # packed rows per tile (512 KiB f32 per plane)


def _round_up(a, m):
    return (a + m - 1) // m * m


def _depol_kernel(x_ref, b_ref, o_ref):
    """One lane-dense tile: (TM, 128) @ (128, 128) block-diagonal superoperator."""
    o_ref[...] = jnp.dot(x_ref[...], b_ref[...],
                         preferred_element_type=jnp.float32)


def make_kraus(p):
    """Kraus operators of the depolarizing channel, shape (2, 2, 4), complex64."""
    I = np.array([[1, 0], [0, 1]], dtype=np.complex64)
    X = np.array([[0, 1], [1, 0]], dtype=np.complex64)
    Y = np.array([[0, -1j], [1j, 0]], dtype=np.complex64)
    Z = np.array([[1, 0], [0, -1]], dtype=np.complex64)
    K = np.zeros((2, 2, 4), dtype=np.complex64)
    K[:, :, 0] = np.sqrt(1.0 - 3.0 / 4.0 * p) * I
    K[:, :, 1] = np.sqrt(p / 4.0) * X
    K[:, :, 2] = np.sqrt(p / 4.0) * Y
    K[:, :, 3] = np.sqrt(p / 4.0) * Z
    return jnp.asarray(K)


def _superoperator_blockdiag(K):
    """(128, 128) f32 matrix applying the channel to 16 packed 2x2 matrices.

    The packed layout of one matrix is 8 interleaved floats
    [re00, im00, re01, im01, re10, im10, re11, im11] (row-major rho).
    """
    A = jnp.einsum('imk,jnk->ijmn', K, jnp.conj(K)).reshape(4, 4)
    Ar = jnp.real(A).astype(jnp.float32)
    Ai = jnp.imag(A).astype(jnp.float32)
    # 8x8 real matrix M: out_float = M @ in_float for interleaved (re, im).
    M = jnp.zeros((8, 8), jnp.float32)
    M = M.at[0::2, 0::2].set(Ar)
    M = M.at[0::2, 1::2].set(-Ai)
    M = M.at[1::2, 0::2].set(Ai)
    M = M.at[1::2, 1::2].set(Ar)
    # Row-vector convention inside the kernel: out_row = in_row @ B,
    # B = blockdiag of 16 copies of M^T.
    return jnp.kron(jnp.eye(MATS_PER_ROW, dtype=jnp.float32), M.T)


@jax.jit
def depolarizing_channel(rho, K):
    """Pallas-backed forward of DepolarizingChannel.

    rho: complex64 array of shape (b, 2, 2) or (b, c, 2, 2).
    Returns an array of the same shape / dtype.
    """
    rho = rho.astype(jnp.complex64)
    assert rho.shape[-2:] == (2, 2), "rho must be a batch of 2x2 density matrices"
    assert rho.ndim in (3, 4), "rho must have shape (b, 2, 2) or (b, c, 2, 2)"
    batch_shape = rho.shape[:-2]
    N = int(np.prod(batch_shape))

    B = _superoperator_blockdiag(K)                       # (128, 128) f32, param glue

    # Interleaved (re, im) float32 view of vectorized rho: (N, 8).  This split
    # plus the pad/reshape below fuses into a single XLA pass.
    x = jnp.stack([jnp.real(rho), jnp.imag(rho)], axis=-1).reshape(N, 8)
    x = x.astype(jnp.float32)

    # Pack 16 matrices per 128-lane row -> lane-dense (rows, 128) layout.
    rows = _round_up(N, MATS_PER_ROW) // MATS_PER_ROW
    tm = min(BLOCK_ROWS, _round_up(rows, 8))              # sublane-aligned tile
    rows_padded = _round_up(rows, tm)
    n_padded = rows_padded * MATS_PER_ROW
    if n_padded != N:
        x = jnp.pad(x, ((0, n_padded - N), (0, 0)))
    xp = x.reshape(rows_padded, LANES)

    out = pl.pallas_call(
        _depol_kernel,
        out_shape=jax.ShapeDtypeStruct((rows_padded, LANES), jnp.float32),
        grid_spec=pltpu.PrefetchScalarGridSpec(
            num_scalar_prefetch=0,
            grid=(rows_padded // tm,),
            in_specs=[
                pl.BlockSpec((tm, LANES), lambda i: (i, 0)),      # packed rho tiles
                pl.BlockSpec((LANES, LANES), lambda i: (0, 0)),   # resident B
            ],
            out_specs=pl.BlockSpec((tm, LANES), lambda i: (i, 0)),
        ),
        compiler_params=pltpu.CompilerParams(
            dimension_semantics=("parallel",)),
    )(xp, B)

    # Unpack: (rows, 128) -> (N, 4, 2) interleaved -> complex64 (.., 2, 2).
    y = out.reshape(-1, 8)[:N].reshape(N, 4, 2)
    res = jax.lax.complex(y[..., 0], y[..., 1])
    return res.reshape(*batch_shape, 2, 2).astype(jnp.complex64)


def _random_density_matrices(key, batch_shape):
    """Deterministic batch of valid 2x2 density matrices (hermitian, PSD, trace 1)."""
    k1, k2 = jax.random.split(key)
    m = (jax.random.normal(k1, batch_shape + (2, 2), dtype=jnp.float32)
         + 1j * jax.random.normal(k2, batch_shape + (2, 2), dtype=jnp.float32))
    m = m.astype(jnp.complex64)
    rho = jnp.einsum('...ik,...jk->...ij', m, jnp.conj(m))
    tr = jnp.trace(rho, axis1=-2, axis2=-1)[..., None, None]
    return (rho / tr).astype(jnp.complex64)


if __name__ == "__main__":
    p = 0.1
    K = make_kraus(p)
    key = jax.random.PRNGKey(0)
    k3, k4 = jax.random.split(key)

    # 4-D case: (batch=2, channels=4, 2, 2)
    rho4 = _random_density_matrices(k3, (2, 4))
    out4 = jax.block_until_ready(depolarizing_channel(rho4, K))
    ref4 = jnp.einsum('imk,bcmn,jnk->bcij', K, rho4, jnp.conj(K))
    assert out4.shape == rho4.shape and out4.dtype == jnp.complex64
    assert np.allclose(np.asarray(out4), np.asarray(ref4), atol=1e-5, rtol=1e-5)

    # 3-D case: (batch=2, 2, 2)
    rho3 = _random_density_matrices(k4, (2,))
    out3 = jax.block_until_ready(depolarizing_channel(rho3, K))
    ref3 = jnp.einsum('imk,bmn,jnk->bij', K, rho3, jnp.conj(K))
    assert out3.shape == rho3.shape and out3.dtype == jnp.complex64
    assert np.allclose(np.asarray(out3), np.asarray(ref3), atol=1e-5, rtol=1e-5)

    print("KERNEL_OK")
</pallas_src>

<mosaic_0001>
module attributes {stable_mosaic.version = 11 : i64} {
  func.func @_depol_kernel(%arg0: i32, %arg1: memref<8x128xf32, #tpu.memory_space<vmem>>, %arg2: memref<128x128xf32, #tpu.memory_space<vmem>>, %arg3: memref<8x128xf32, #tpu.memory_space<vmem>>) attributes {dimension_semantics = [#tpu.dimension_semantics<parallel>], iteration_bounds = array<i64: 1>, scalar_prefetch = 0 : i64, scratch_operands = 0 : i64, tpu.core_type = #tpu.core_type<tc>, window_params = [{transform_indices = @transform_0, window_bounds = array<i64: 8, 128>}, {pipeline_mode = #tpu.pipeline_mode<synchronous>, transform_indices = @transform_1, window_bounds = array<i64: 128, 128>}, {transform_indices = @transform_2, window_bounds = array<i64: 8, 128>}]} {
    %c0 = arith.constant 0 : index
    %c0_0 = arith.constant 0 : index
    %0 = vector.load %arg1[%c0, %c0_0] : memref<8x128xf32, #tpu.memory_space<vmem>>, vector<8x128xf32>
    %c0_1 = arith.constant 0 : index
    %c0_2 = arith.constant 0 : index
    %1 = vector.load %arg2[%c0_1, %c0_2] : memref<128x128xf32, #tpu.memory_space<vmem>>, vector<128x128xf32>
    %cst = arith.constant dense<0.000000e+00> : vector<8x128xf32>
    %2 = tpu.matmul %0, %1, %cst {dimension_numbers = #tpu.dot_dimension_numbers<[1], [0], [0], [1], [0, 0, 1, 1], [], []>} : vector<8x128xf32>, vector<128x128xf32>, vector<8x128xf32> -> vector<8x128xf32>
    %c0_3 = arith.constant 0 : index
    %c0_4 = arith.constant 0 : index
    %3 = vector.load %arg3[%c0_3, %c0_4] : memref<8x128xf32, #tpu.memory_space<vmem>>, vector<8x128xf32>
    tpu.vector_store %arg3[%c0_3, %c0_4], %2 {strides = array<i32>} : memref<8x128xf32, #tpu.memory_space<vmem>>, vector<8x128xf32>,
    return
  }
  func.func @transform_0(%arg0: i32) -> (i32, i32) {
    %c0_i32 = arith.constant 0 : i32
    %c0_i32_0 = arith.constant 0 : i32
    return %arg0, %c0_i32 : i32, i32
  }
  func.func @transform_1(%arg0: i32) -> (i32, i32) {
    %c0_i32 = arith.constant 0 : i32
    %c0_i32_0 = arith.constant 0 : i32
    %c0_i32_1 = arith.constant 0 : i32
    return %c0_i32, %c0_i32_0 : i32, i32
  }
  func.func @transform_2(%arg0: i32) -> (i32, i32) {
    %c0_i32 = arith.constant 0 : i32
    %c0_i32_0 = arith.constant 0 : i32
    return %arg0, %c0_i32 : i32, i32
  }
}

</mosaic_0001>

<llo_original>
// kernel: custom-call.2
$region0: #{custom-call.2}
  %s0 = inlined_call_operand.hbm [shape: c64[2,2,4], index: 0, kind: input, shape index: {}]
  %s1 = inlined_call_operand.vmem [shape: f32[2,2,4], index: 1, kind: output, shape index: {}]
  $region1: #{custom-call.2} parent=0
    #allocation0 [shape = 's32[1]{0}', space=sflag, size = 0x4, scoped, tag = 'scoped memory for custom-call.2']
    %2 = vsyncpa [#allocation0], 0
    %s3 = sshll.u32 %s1, 4
    %s4 = int_to_ptr.vmem [resolvable:$true] %s3
    %6 = dma.hbm_to_vmem [thread:$0]  %s0, 64, %s4, [#allocation0]
    %7 = dma.done [#allocation0], 64
    %8 = vsyncpa [#allocation0], 1

// kernel: custom-call.3
$region0: #{custom-call.3}
  %s0 = inlined_call_operand.hbm [shape: c64[2,2,4], index: 0, kind: input, shape index: {}]
  %s1 = inlined_call_operand.vmem [shape: f32[2,2,4], index: 1, kind: output, shape index: {}]
  %s2 = scalar_lea.hbm %s0, 64
  $region1: #{custom-call.3} parent=0
    #allocation0 [shape = 's32[1]{0}', space=sflag, size = 0x4, scoped, tag = 'scoped memory for custom-call.3']
    %3 = vsyncpa [#allocation0], 0
    %s4 = sshll.u32 %s1, 4
    %s5 = int_to_ptr.vmem [resolvable:$true] %s4
    %7 = dma.hbm_to_vmem [thread:$0]  %s2, 64, %s5, [#allocation0]
    %8 = dma.done [#allocation0], 64
    %9 = vsyncpa [#allocation0], 1

// kernel: custom-call
$region0: #{custom-call}
  %s0 = inlined_call_operand.hbm [shape: c64[2,4,2,2], index: 0, kind: input, shape index: {}]
  %s1 = inlined_call_operand.vmem [shape: f32[2,4,2,2], index: 1, kind: output, shape index: {}]
  $region1: #{custom-call} parent=0
    #allocation0 [shape = 's32[1]{0}', space=sflag, size = 0x4, scoped, tag = 'scoped memory for custom-call']
    %2 = vsyncpa [#allocation0], 0
    %s3 = sshll.u32 %s1, 4
    %s4 = int_to_ptr.vmem [resolvable:$true] %s3
    %6 = dma.hbm_to_vmem [thread:$0]  %s0, 128, %s4, [#allocation0]
    %7 = dma.done [#allocation0], 128
    %8 = vsyncpa [#allocation0], 1

// kernel: custom-call.1
$region0: #{custom-call.1}
  %s0 = inlined_call_operand.hbm [shape: c64[2,4,2,2], index: 0, kind: input, shape index: {}]
  %s1 = inlined_call_operand.vmem [shape: f32[2,4,2,2], index: 1, kind: output, shape index: {}]
  %s2 = scalar_lea.hbm %s0, 128
  $region1: #{custom-call.1} parent=0
    #allocation0 [shape = 's32[1]{0}', space=sflag, size = 0x4, scoped, tag = 'scoped memory for custom-call.1']
    %3 = vsyncpa [#allocation0], 0
    %s4 = sshll.u32 %s1, 4
    %s5 = int_to_ptr.vmem [resolvable:$true] %s4
    %7 = dma.hbm_to_vmem [thread:$0]  %s2, 128, %s5, [#allocation0]
    %8 = dma.done [#allocation0], 128
    %9 = vsyncpa [#allocation0], 1

// kernel: custom-call.4
$region0: #{custom-call.4}
  %s0 = inlined_call_operand.vmem [shape: f32[2,4,2,2], index: 0, kind: input, shape index: {}]
  %s1 = inlined_call_operand.vmem [shape: f32[2,4,2,2], index: 1, kind: input, shape index: {}]
  %s2 = inlined_call_operand.vmem [shape: c64[2,4,2,2], index: 2, kind: output, shape index: {}]
  %s4 = scalar_lea.vmem %s2, 8
  %v5 = vld [vmem:[%s0] sm:$0xff]
  %6 = vst [vmem:[%s2] sm:$0xff] %v5
  %v7 = vld [vmem:[%s1] sm:$0xff]
  %8 = vst [vmem:[%s4] sm:$0xff] %v7

// kernel: depolarizing_channel.1
$region0: #{depolarizing_channel.1}
  #allocation0 [shape = 'u32[]', space=smem, size = 0x4, offset = 0x4, fixed_abs, tag = 'smem constant byte address 0x4 - core index']
  #allocation1 [shape = 'u32[144,128]{1,0:T(1,128)}', space=vmem, size = 0x12000, scoped, tag = 'internal scratch']
  %s0 = inlined_call_operand.vmem [shape: f32[8,128], index: 0, kind: input, shape index: {}]
  %s1 = inlined_call_operand.vmem [shape: f32[128,128], index: 1, kind: input, shape index: {}]
  %s2 = inlined_call_operand.vmem [shape: f32[8,128], index: 2, kind: output, shape index: {}]
  %s3 = sld [smem:[#allocation0]]
  $region18: #{depolarizing_channel.1} parent=0
    _
  %s5 = ssub.s32 1, %s3
  %s6 = scalar_select 0, %s5, %s3
  // Predicated region
  $region2: #{depolarizing_channel.1} parent=0 // pred_check
    _
  $region3: #{depolarizing_channel.1} parent=0 // pred_check_branch
    %8 = sbr.rel (0) target = $region5
  $region4: #{depolarizing_channel.1} parent=0 // pred_region
    _
  $region5: #{depolarizing_channel.1} parent=0 // pred_fallthru
    _
  // Predicated region
  $region6: #{depolarizing_channel.1} parent=0 // pred_check
    _
  $region7: #{depolarizing_channel.1} parent=0 // pred_check_branch
    %10 = sbr.rel (0) target = $region9
  $region8: #{depolarizing_channel.1} parent=0 // pred_region
    _
  $region9: #{depolarizing_channel.1} parent=0 // pred_fallthru
    _
  %v11 = vld [vmem:[%s0] sm:$0xff]
  %v12 = vld [vmem:[%s1] sm:$0xff]
  %v13 = vld [vmem:[%s1 + $0x8] sm:$0xff]
  %v14 = vld [vmem:[%s1 + $0x10] sm:$0xff]
  %v15 = vld [vmem:[%s1 + $0x18] sm:$0xff]
  %v16 = vld [vmem:[%s1 + $0x20] sm:$0xff]
  %v17 = vld [vmem:[%s1 + $0x28] sm:$0xff]
  %v18 = vld [vmem:[%s1 + $0x30] sm:$0xff]
  %v19 = vld [vmem:[%s1 + $0x38] sm:$0xff]
  %v20 = vld [vmem:[%s1 + $0x40] sm:$0xff]
  %v21 = vld [vmem:[%s1 + $0x48] sm:$0xff]
  %v22 = vld [vmem:[%s1 + $0x50] sm:$0xff]
  %v23 = vld [vmem:[%s1 + $0x58] sm:$0xff]
  %v24 = vld [vmem:[%s1 + $0x60] sm:$0xff]
  %v25 = vld [vmem:[%s1 + $0x68] sm:$0xff]
  %v26 = vld [vmem:[%s1 + $0x70] sm:$0xff]
  %v27 = vld [vmem:[%s1 + $0x78] sm:$0xff]
  %28 = vmatprep.subr.mxu0 0.0
  %29 = vmatpush1.msra.mxu0 %v27
  %30 = vmatprep.subr.mxu0 0.0
  %31 = vmatpush1.msra.mxu0 %v26
  %32 = vmatprep.subr.mxu0 0.0
  %33 = vmatpush1.msra.mxu0 %v25
  %34 = vmatprep.subr.mxu0 0.0
  %35 = vmatpush1.msra.mxu0 %v24
  %36 = vmatprep.subr.mxu0 0.0
  %37 = vmatpush1.msra.mxu0 %v23
  %38 = vmatprep.subr.mxu0 0.0
  %39 = vmatpush1.msra.mxu0 %v22
  %40 = vmatprep.subr.mxu0 0.0
  %41 = vmatpush1.msra.mxu0 %v21
  %42 = vmatprep.subr.mxu0 0.0
  %43 = vmatpush1.msra.mxu0 %v20
  %44 = vmatprep.subr.mxu0 0.0
  %45 = vmatpush1.msra.mxu0 %v19
  %46 = vmatprep.subr.mxu0 0.0
  %47 = vmatpush1.msra.mxu0 %v18
  %48 = vmatprep.subr.mxu0 0.0
  %49 = vmatpush1.msra.mxu0 %v17
  %50 = vmatprep.subr.mxu0 0.0
  %51 = vmatpush1.msra.mxu0 %v16
  %52 = vmatprep.subr.mxu0 0.0
  %53 = vmatpush1.msra.mxu0 %v15
  %54 = vmatprep.subr.mxu0 0.0
  %55 = vmatpush1.msra.mxu0 %v14
  %56 = vmatprep.subr.mxu0 0.0
  %57 = vmatpush1.msra.mxu0 %v13
  %58 = vmatprep.subr.mxu0 0.0
  %59 = vmatpush1.msra.mxu0 %v12
  %60 = vmatprep.subr.mxu0 0.0
  %61 = vmatpush2.msra.mxu0 0.0
  %62 = vmatprep.subr.mxu0 0.0
  %63 = vmatpush2.msra.mxu0 0.0
  %64 = vmatprep.subr.mxu0 0.0
  %65 = vmatpush2.msra.mxu0 0.0
  %66 = vmatprep.subr.mxu0 0.0
  %67 = vmatpush2.msra.mxu0 0.0
  %68 = vmatprep.subr.mxu0 0.0
  %69 = vmatpush2.msra.mxu0 0.0
  %70 = vmatprep.subr.mxu0 0.0
  %71 = vmatpush2.msra.mxu0 0.0
  %72 = vmatprep.subr.mxu0 0.0
  %73 = vmatpush2.msra.mxu0 0.0
  %74 = vmatprep.subr.mxu0 0.0
  %75 = vmatpush2.msra.mxu0 0.0
  %76 = vmatprep.subr.mxu0 0.0
  %77 = vmatpush2.msra.mxu0 0.0
  %78 = vmatprep.subr.mxu0 0.0
  %79 = vmatpush2.msra.mxu0 0.0
  %80 = vmatprep.subr.mxu0 0.0
  %81 = vmatpush2.msra.mxu0 0.0
  %82 = vmatprep.subr.mxu0 0.0
  %83 = vmatpush2.msra.mxu0 0.0
  %84 = vmatprep.subr.mxu0 0.0
  %85 = vmatpush2.msra.mxu0 0.0
  %86 = vmatprep.subr.mxu0 0.0
  %87 = vmatpush2.msra.mxu0 0.0
  %88 = vmatprep.subr.mxu0 0.0
  %89 = vmatpush2.msra.mxu0 0.0
  %90 = vmatprep.subr.mxu0 0.0
  %91 = vmatpush2.msra.mxu0 0.0
  %92 = vmatprep.mubr.f32.mxu0 0.0
  %93 = vmatmul.mubr.f32.gmra.mxu0 %v11
  %v94 = vpop.f32.mrf.mxu0
  %v95 = vadd.f32 0.0, %v94
  %v96 = vpop.f32.mrf.mxu0
  %97 = vdwg.mxu0
  %98 = vst [vmem:[%s2] sm:$0xff] %v95
  // Predicated region
  $region10: #{depolarizing_channel.1} parent=0 // pred_check
    _
  $region11: #{depolarizing_channel.1} parent=0 // pred_check_branch
    %100 = sbr.rel (0) target = $region13
  $region12: #{depolarizing_channel.1} parent=0 // pred_region
    _
  $region13: #{depolarizing_channel.1} parent=0 // pred_fallthru
    _
  // Predicated region
  $region14: #{depolarizing_channel.1} parent=0 // pred_check
    _
  $region15: #{depolarizing_channel.1} parent=0 // pred_check_branch
    %102 = sbr.rel (0) target = $region17
  $region16: #{depolarizing_channel.1} parent=0 // pred_region
    _
  $region17: #{depolarizing_channel.1} parent=0 // pred_fallthru
    _

</llo_original>
